<compile_context>
chip_gen: v5e
topology: v5e:2x2
jax: 0.10.0
libtpu: 0.0.40
codegen_flags: <defaults>
</compile_context>

<pallas_src>
import functools
import math

import jax
import jax.numpy as jnp
from jax.experimental import pallas as pl
from jax.experimental.pallas import tpu as pltpu

# ---------------- synthetic tiny-Llama config ----------------
VOCAB = 64
VOCAB_PAD = 128          # lane-dense padded LM-head / logits width
HIDDEN = 32
N_HEADS = 2
HEAD_DIM = HIDDEN // N_HEADS
FFN = 64
EPS = 1e-6


def _rmsnorm(x, w):
    var = jnp.mean(x * x, axis=-1, keepdims=True)
    return x * jax.lax.rsqrt(var + EPS) * w


def _bf16(x):
    return x.astype(jnp.bfloat16)


# ---------------- fused per-sequence forward kernel ----------------
def fused_forward_kernel(tok_ref, embed_ref, wqkv_ref, wo_ref, wgu_ref,
                         wd_ref, lmh_ref, norms_ref,
                         logits_ref, loss_tok_ref, *, S, inv_norm):
    H, D, F, V, VP = HIDDEN, HEAD_DIM, FFN, VOCAB, VOCAB_PAD

    ids = tok_ref[0, :, 0:1]        # [S, 1] int32: token ids of this sequence
    labels = tok_ref[0, :, 1:2]     # [S, 1] int32: next-token labels (last row dummy)

    # --- embedding lookup as one-hot matmul (fine at V=64; see gather TODO) ---
    vcol = jax.lax.broadcasted_iota(jnp.int32, (S, V), 1)
    onehot = (vcol == ids).astype(jnp.bfloat16)
    x = jnp.dot(onehot, embed_ref[...], preferred_element_type=jnp.float32)   # [S, H] f32

    # --- attention sub-block ---
    n1 = _rmsnorm(x, norms_ref[0:1, :])
    qkv = jnp.dot(_bf16(n1), wqkv_ref[...],
                  preferred_element_type=jnp.float32)                          # [S, 3H]

    scale = jnp.float32(1.0 / math.sqrt(D))
    qi = jax.lax.broadcasted_iota(jnp.int32, (S, S), 0)
    ki = jax.lax.broadcasted_iota(jnp.int32, (S, S), 1)
    causal = ki <= qi

    # Batch is handled by the grid; heads are a tiny static loop (N_HEADS=2)
    # whose outputs are contracted against Wo's matching row-block and
    # accumulated at static offsets -- no concatenate / merge_heads relayout.
    attn_proj = jnp.zeros((S, H), jnp.float32)
    for hh in range(N_HEADS):
        c0 = hh * D
        q = _bf16(qkv[:, c0:c0 + D])                   # [S, D]
        k = _bf16(qkv[:, H + c0:H + c0 + D])           # [S, D]
        v = _bf16(qkv[:, 2 * H + c0:2 * H + c0 + D])   # [S, D]
        s = jax.lax.dot_general(q, k, (((1,), (1,)), ((), ())),
                                preferred_element_type=jnp.float32) * scale    # [S, S]
        s = jnp.where(causal, s, jnp.float32(-1e30))
        m = jnp.max(s, axis=-1, keepdims=True)
        p = jnp.exp(s - m)
        p = p * pl.reciprocal(jnp.sum(p, axis=-1, keepdims=True), approx=True)
        o = jnp.dot(_bf16(p), v, preferred_element_type=jnp.float32)           # [S, D]
        attn_proj = attn_proj + jnp.dot(
            _bf16(o), wo_ref[c0:c0 + D, :], preferred_element_type=jnp.float32)
    h = x + attn_proj

    # --- SwiGLU MLP sub-block (fused gate/up matmul, exactly 128-lane output) ---
    n2 = _rmsnorm(h, norms_ref[1:2, :])
    gu = jnp.dot(_bf16(n2), wgu_ref[...], preferred_element_type=jnp.float32)  # [S, 2F]
    gate = gu[:, :F]
    up = gu[:, F:]
    act = gate * jax.nn.sigmoid(gate) * up              # silu(gate) * up
    h = h + jnp.dot(_bf16(act), wd_ref[...], preferred_element_type=jnp.float32)

    # --- final norm + padded LM head (lane-dense [S, 128] store) ---
    hf = _rmsnorm(h, norms_ref[2:3, :])
    logits = jnp.dot(_bf16(hf), lmh_ref[...], preferred_element_type=jnp.float32)  # [S, VP]
    logits_ref[0] = logits

    # --- HF-style shifted cross-entropy (per-token partials, pre-scaled) ---
    col = jax.lax.broadcasted_iota(jnp.int32, (S, VP), 1)
    in_vocab = col < V
    lmasked = jnp.where(in_vocab, logits, jnp.float32(-1e30))   # mask pad vocab cols
    m = jnp.max(lmasked, axis=-1, keepdims=True)
    lse = jnp.log(jnp.sum(jnp.exp(lmasked - m), axis=-1, keepdims=True)) + m
    lab_onehot = (col == labels).astype(jnp.float32)            # labels < VOCAB
    lab_logit = jnp.sum(logits * lab_onehot, axis=-1, keepdims=True)
    per_tok = lse - lab_logit                                    # [S, 1]
    row = jax.lax.broadcasted_iota(jnp.int32, (S, 1), 0)
    valid = (row != (S - 1)).astype(jnp.float32)                 # drop last position
    loss_tok_ref[0] = per_tok * valid * jnp.float32(inv_norm)


def fused_forward(tok_lab, params, *, B, S):
    kern = functools.partial(fused_forward_kernel, S=S,
                             inv_norm=1.0 / (B * (S - 1)))
    logits_pad, loss_tok = pl.pallas_call(
        kern,
        out_shape=(jax.ShapeDtypeStruct((B, S, VOCAB_PAD), jnp.float32),
                   jax.ShapeDtypeStruct((B, S, 1), jnp.float32)),
        grid=(B,),
        in_specs=[
            pl.BlockSpec((1, S, 2), lambda b: (b, 0, 0)),             # ids|labels
            pl.BlockSpec((VOCAB, HIDDEN), lambda b: (0, 0)),          # embed (bf16)
            pl.BlockSpec((HIDDEN, 3 * HIDDEN), lambda b: (0, 0)),     # fused QKV
            pl.BlockSpec((HIDDEN, HIDDEN), lambda b: (0, 0)),         # Wo
            pl.BlockSpec((HIDDEN, 2 * FFN), lambda b: (0, 0)),        # fused gate|up
            pl.BlockSpec((FFN, HIDDEN), lambda b: (0, 0)),            # down proj
            pl.BlockSpec((HIDDEN, VOCAB_PAD), lambda b: (0, 0)),      # padded LM head
            pl.BlockSpec((3, HIDDEN), lambda b: (0, 0)),              # packed norms
        ],
        out_specs=(pl.BlockSpec((1, S, VOCAB_PAD), lambda b: (b, 0, 0)),
                   pl.BlockSpec((1, S, 1), lambda b: (b, 0, 0))),
        compiler_params=pltpu.CompilerParams(
            dimension_semantics=("parallel",)),
    )(tok_lab, params["embed"], params["wqkv"], params["wo"], params["wgu"],
      params["wd"], params["lm_head"], params["norms"])
    return logits_pad, loss_tok


# ---------------- parameters (deterministic synthetic init) ----------------
def init_params(key):
    ks = jax.random.split(key, 6)
    s = 0.02
    lm_head = jax.random.normal(ks[5], (HIDDEN, VOCAB), jnp.float32) * s
    lm_head_pad = jnp.zeros((HIDDEN, VOCAB_PAD), jnp.float32)
    lm_head_pad = lm_head_pad.at[:, :VOCAB].set(lm_head)
    return {
        "embed": (jax.random.normal(ks[0], (VOCAB, HIDDEN), jnp.float32) * s
                  ).astype(jnp.bfloat16),
        # fused Q|K|V projection weight [H, 3H]
        "wqkv": (jax.random.normal(ks[1], (HIDDEN, 3 * HIDDEN), jnp.float32) * s
                 ).astype(jnp.bfloat16),
        "wo": (jax.random.normal(ks[2], (HIDDEN, HIDDEN), jnp.float32) * s
               ).astype(jnp.bfloat16),
        # fused gate|up projection weight [H, 2F] (exactly 128 lanes)
        "wgu": (jax.random.normal(ks[3], (HIDDEN, 2 * FFN), jnp.float32) * s
                ).astype(jnp.bfloat16),
        "wd": (jax.random.normal(ks[4], (FFN, HIDDEN), jnp.float32) * s
               ).astype(jnp.bfloat16),
        # LM head padded to 128 lanes; pad columns are zero (masked in the loss)
        "lm_head": lm_head_pad.astype(jnp.bfloat16),
        # norm1 | norm2 | norm_f packed into one array (one DMA instead of three)
        "norms": jnp.ones((3, HIDDEN), jnp.float32),
    }


# ---------------- forward: mirrors TorchScriptWrapper.forward ----------------
def forward(params, input_ids, target_ids):
    B, S = input_ids.shape
    # next-token labels per row (last column is a dummy, masked in-kernel)
    labels_next = jnp.concatenate(
        [target_ids[:, 1:], jnp.zeros((B, 1), target_ids.dtype)], axis=1)
    tok_lab = jnp.stack([input_ids, labels_next], axis=-1).astype(jnp.int32)  # [B,S,2]

    logits_pad, loss_tok = fused_forward(tok_lab, params, B=B, S=S)
    logits = logits_pad[:, :, :VOCAB]      # drop the lane-padding columns
    loss = jnp.sum(loss_tok)               # partials already scaled by 1/(B*(S-1))
    return loss, logits


if __name__ == "__main__":
    key = jax.random.PRNGKey(0)
    pkey, ikey = jax.random.split(key, 2)
    params = init_params(pkey)

    B, S = 2, 8
    input_ids = jax.random.randint(ikey, (B, S), 0, VOCAB, dtype=jnp.int32)
    target_ids = input_ids  # standard causal-LM training labels

    loss, logits = jax.jit(forward)(params, input_ids, target_ids)
    jax.block_until_ready((loss, logits))
    assert loss.shape == () and logits.shape == (B, S, VOCAB)
    print("KERNEL_OK")
</pallas_src>

<mosaic_0001>
module attributes {stable_mosaic.version = 11 : i64} {
  func.func @fused_forward_kernel(%arg0: i32, %arg1: memref<1x8x2xi32, #tpu.memory_space<vmem>>, %arg2: memref<64x32xbf16, #tpu.memory_space<vmem>>, %arg3: memref<32x96xbf16, #tpu.memory_space<vmem>>, %arg4: memref<32x32xbf16, #tpu.memory_space<vmem>>, %arg5: memref<32x128xbf16, #tpu.memory_space<vmem>>, %arg6: memref<64x32xbf16, #tpu.memory_space<vmem>>, %arg7: memref<32x128xbf16, #tpu.memory_space<vmem>>, %arg8: memref<3x32xf32, #tpu.memory_space<vmem>>, %arg9: memref<1x8x128xf32, #tpu.memory_space<vmem>>, %arg10: memref<1x8x1xf32, #tpu.memory_space<vmem>>) attributes {dimension_semantics = [#tpu.dimension_semantics<parallel>], iteration_bounds = array<i64: 2>, scalar_prefetch = 0 : i64, scratch_operands = 0 : i64, tpu.core_type = #tpu.core_type<tc>, window_params = [{transform_indices = @transform_0, window_bounds = array<i64: 1, 8, 2>}, {pipeline_mode = #tpu.pipeline_mode<synchronous>, transform_indices = @transform_1, window_bounds = array<i64: 64, 32>}, {pipeline_mode = #tpu.pipeline_mode<synchronous>, transform_indices = @transform_2, window_bounds = array<i64: 32, 96>}, {pipeline_mode = #tpu.pipeline_mode<synchronous>, transform_indices = @transform_3, window_bounds = array<i64: 32, 32>}, {pipeline_mode = #tpu.pipeline_mode<synchronous>, transform_indices = @transform_4, window_bounds = array<i64: 32, 128>}, {pipeline_mode = #tpu.pipeline_mode<synchronous>, transform_indices = @transform_5, window_bounds = array<i64: 64, 32>}, {pipeline_mode = #tpu.pipeline_mode<synchronous>, transform_indices = @transform_6, window_bounds = array<i64: 32, 128>}, {pipeline_mode = #tpu.pipeline_mode<synchronous>, transform_indices = @transform_7, window_bounds = array<i64: 3, 32>}, {transform_indices = @transform_8, window_bounds = array<i64: 1, 8, 128>}, {transform_indices = @transform_9, window_bounds = array<i64: 1, 8, 1>}]} {
    %c0 = arith.constant 0 : index
    %c0_0 = arith.constant 0 : index
    %c0_1 = arith.constant 0 : index
    %0 = vector.load %arg1[%c0, %c0_0, %c0_1] : memref<1x8x2xi32, #tpu.memory_space<vmem>>, vector<1x8x1xi32>
    %1 = vector.shape_cast %0 : vector<1x8x1xi32> to vector<8x1xi32>
    %c0_2 = arith.constant 0 : index
    %c0_3 = arith.constant 0 : index
    %c1 = arith.constant 1 : index
    %2 = vector.load %arg1[%c0_2, %c0_3, %c1] : memref<1x8x2xi32, #tpu.memory_space<vmem>>, vector<1x8x1xi32>
    %3 = vector.shape_cast %2 : vector<1x8x1xi32> to vector<8x1xi32>
    %4 = tpu.iota {dimensions = array<i32: 1>} : vector<8x64xi32>
    %5 = vector.broadcast %1 : vector<8x1xi32> to vector<8x64xi32>
    %6 = arith.cmpi eq, %4, %5 : vector<8x64xi32>
    %7 = arith.extui %6 : vector<8x64xi1> to vector<8x64xi32>
    %8 = arith.sitofp %7 : vector<8x64xi32> to vector<8x64xf32>
    %9 = arith.truncf %8 : vector<8x64xf32> to vector<8x64xbf16>
    %c0_4 = arith.constant 0 : index
    %c0_5 = arith.constant 0 : index
    %10 = vector.load %arg2[%c0_4, %c0_5] : memref<64x32xbf16, #tpu.memory_space<vmem>>, vector<64x32xbf16>
    %cst = arith.constant dense<0.000000e+00> : vector<8x32xf32>
    %11 = tpu.matmul %9, %10, %cst {dimension_numbers = #tpu.dot_dimension_numbers<[1], [0], [0], [1], [0, 0, 1, 1], [], []>} : vector<8x64xbf16>, vector<64x32xbf16>, vector<8x32xf32> -> vector<8x32xf32>
    %c0_6 = arith.constant 0 : index
    %c0_7 = arith.constant 0 : index
    %12 = vector.load %arg8[%c0_6, %c0_7] : memref<3x32xf32, #tpu.memory_space<vmem>>, vector<1x32xf32>
    %13 = arith.mulf %11, %11 : vector<8x32xf32>
    %cst_8 = arith.constant dense<0.000000e+00> : vector<8xf32>
    %14 = vector.multi_reduction <add>, %13, %cst_8 [1] : vector<8x32xf32> to vector<8xf32>
    %15 = vector.shape_cast %14 : vector<8xf32> to vector<8x1xf32>
    %cst_9 = arith.constant 3.200000e+01 : f32
    %16 = vector.broadcast %cst_9 : f32 to vector<8x1xf32>
    %17 = arith.divf %15, %16 : vector<8x1xf32>
    %cst_10 = arith.constant 9.99999997E-7 : f32
    %18 = vector.broadcast %cst_10 : f32 to vector<8x1xf32>
    %19 = arith.addf %17, %18 : vector<8x1xf32>
    %20 = math.rsqrt %19 : vector<8x1xf32>
    %21 = vector.broadcast %20 : vector<8x1xf32> to vector<8x32xf32>
    %22 = arith.mulf %11, %21 : vector<8x32xf32>
    %23 = vector.broadcast %12 : vector<1x32xf32> to vector<8x32xf32>
    %24 = arith.mulf %22, %23 : vector<8x32xf32>
    %25 = arith.truncf %24 : vector<8x32xf32> to vector<8x32xbf16>
    %c0_11 = arith.constant 0 : index
    %c0_12 = arith.constant 0 : index
    %26 = vector.load %arg3[%c0_11, %c0_12] : memref<32x96xbf16, #tpu.memory_space<vmem>>, vector<32x96xbf16>
    %cst_13 = arith.constant dense<0.000000e+00> : vector<8x96xf32>
    %27 = tpu.matmul %25, %26, %cst_13 {dimension_numbers = #tpu.dot_dimension_numbers<[1], [0], [0], [1], [0, 0, 1, 1], [], []>} : vector<8x32xbf16>, vector<32x96xbf16>, vector<8x96xf32> -> vector<8x96xf32>
    %28 = tpu.iota {dimensions = array<i32: 0>} : vector<8x8xi32>
    %29 = tpu.iota {dimensions = array<i32: 1>} : vector<8x8xi32>
    %30 = arith.cmpi sle, %29, %28 : vector<8x8xi32>
    %cst_14 = arith.constant 0.000000e+00 : f32
    %31 = vector.broadcast %cst_14 : f32 to vector<8x32xf32>
    %32 = vector.extract_strided_slice %27 {offsets = [0, 0], sizes = [8, 16], strides = [1, 1]} : vector<8x96xf32> to vector<8x16xf32>
    %33 = arith.truncf %32 : vector<8x16xf32> to vector<8x16xbf16>
    %34 = vector.extract_strided_slice %27 {offsets = [0, 32], sizes = [8, 16], strides = [1, 1]} : vector<8x96xf32> to vector<8x16xf32>
    %35 = arith.truncf %34 : vector<8x16xf32> to vector<8x16xbf16>
    %36 = vector.extract_strided_slice %27 {offsets = [0, 64], sizes = [8, 16], strides = [1, 1]} : vector<8x96xf32> to vector<8x16xf32>
    %37 = arith.truncf %36 : vector<8x16xf32> to vector<8x16xbf16>
    %cst_15 = arith.constant dense<0.000000e+00> : vector<8x8xf32>
    %38 = tpu.matmul %33, %35, %cst_15 {dimension_numbers = #tpu.dot_dimension_numbers<[1], [1], [0], [0], [0, 0, 1, 0], [], []>} : vector<8x16xbf16>, vector<8x16xbf16>, vector<8x8xf32> -> vector<8x8xf32>
    %cst_16 = arith.constant 2.500000e-01 : f32
    %39 = vector.broadcast %cst_16 : f32 to vector<8x8xf32>
    %40 = arith.mulf %38, %39 : vector<8x8xf32>
    %cst_17 = arith.constant -1.000000e+30 : f32
    %41 = vector.broadcast %cst_17 : f32 to vector<8x8xf32>
    %42 = arith.select %30, %40, %41 : vector<8x8xi1>, vector<8x8xf32>
    %cst_18 = arith.constant dense<0xFF800000> : vector<8xf32>
    %43 = vector.multi_reduction <maximumf>, %42, %cst_18 [1] : vector<8x8xf32> to vector<8xf32>
    %44 = vector.shape_cast %43 : vector<8xf32> to vector<8x1xf32>
    %45 = vector.broadcast %44 : vector<8x1xf32> to vector<8x8xf32>
    %46 = arith.subf %42, %45 : vector<8x8xf32>
    %47 = math.exp %46 : vector<8x8xf32>
    %cst_19 = arith.constant dense<0.000000e+00> : vector<8xf32>
    %48 = vector.multi_reduction <add>, %47, %cst_19 [1] : vector<8x8xf32> to vector<8xf32>
    %49 = vector.shape_cast %48 : vector<8xf32> to vector<8x1xf32>
    %50 = tpu.reciprocal %49 {approx = true} : vector<8x1xf32> -> vector<8x1xf32>
    %51 = vector.broadcast %50 : vector<8x1xf32> to vector<8x8xf32>
    %52 = arith.mulf %47, %51 : vector<8x8xf32>
    %53 = arith.truncf %52 : vector<8x8xf32> to vector<8x8xbf16>
    %cst_20 = arith.constant dense<0.000000e+00> : vector<8x16xf32>
    %54 = tpu.matmul %53, %37, %cst_20 {dimension_numbers = #tpu.dot_dimension_numbers<[1], [0], [0], [1], [0, 0, 1, 1], [], []>} : vector<8x8xbf16>, vector<8x16xbf16>, vector<8x16xf32> -> vector<8x16xf32>
    %55 = arith.truncf %54 : vector<8x16xf32> to vector<8x16xbf16>
    %c0_21 = arith.constant 0 : index
    %c0_22 = arith.constant 0 : index
    %56 = vector.load %arg4[%c0_21, %c0_22] : memref<32x32xbf16, #tpu.memory_space<vmem>>, vector<16x32xbf16>
    %cst_23 = arith.constant dense<0.000000e+00> : vector<8x32xf32>
    %57 = tpu.matmul %55, %56, %cst_23 {dimension_numbers = #tpu.dot_dimension_numbers<[1], [0], [0], [1], [0, 0, 1, 1], [], []>} : vector<8x16xbf16>, vector<16x32xbf16>, vector<8x32xf32> -> vector<8x32xf32>
    %58 = arith.addf %31, %57 : vector<8x32xf32>
    %59 = vector.extract_strided_slice %27 {offsets = [0, 16], sizes = [8, 16], strides = [1, 1]} : vector<8x96xf32> to vector<8x16xf32>
    %60 = arith.truncf %59 : vector<8x16xf32> to vector<8x16xbf16>
    %61 = vector.extract_strided_slice %27 {offsets = [0, 48], sizes = [8, 16], strides = [1, 1]} : vector<8x96xf32> to vector<8x16xf32>
    %62 = arith.truncf %61 : vector<8x16xf32> to vector<8x16xbf16>
    %63 = vector.extract_strided_slice %27 {offsets = [0, 80], sizes = [8, 16], strides = [1, 1]} : vector<8x96xf32> to vector<8x16xf32>
    %64 = arith.truncf %63 : vector<8x16xf32> to vector<8x16xbf16>
    %cst_24 = arith.constant dense<0.000000e+00> : vector<8x8xf32>
    %65 = tpu.matmul %60, %62, %cst_24 {dimension_numbers = #tpu.dot_dimension_numbers<[1], [1], [0], [0], [0, 0, 1, 0], [], []>} : vector<8x16xbf16>, vector<8x16xbf16>, vector<8x8xf32> -> vector<8x8xf32>
    %cst_25 = arith.constant 2.500000e-01 : f32
    %66 = vector.broadcast %cst_25 : f32 to vector<8x8xf32>
    %67 = arith.mulf %65, %66 : vector<8x8xf32>
    %cst_26 = arith.constant -1.000000e+30 : f32
    %68 = vector.broadcast %cst_26 : f32 to vector<8x8xf32>
    %69 = arith.select %30, %67, %68 : vector<8x8xi1>, vector<8x8xf32>
    %cst_27 = arith.constant dense<0xFF800000> : vector<8xf32>
    %70 = vector.multi_reduction <maximumf>, %69, %cst_27 [1] : vector<8x8xf32> to vector<8xf32>
    %71 = vector.shape_cast %70 : vector<8xf32> to vector<8x1xf32>
    %72 = vector.broadcast %71 : vector<8x1xf32> to vector<8x8xf32>
    %73 = arith.subf %69, %72 : vector<8x8xf32>
    %74 = math.exp %73 : vector<8x8xf32>
    %cst_28 = arith.constant dense<0.000000e+00> : vector<8xf32>
    %75 = vector.multi_reduction <add>, %74, %cst_28 [1] : vector<8x8xf32> to vector<8xf32>
    %76 = vector.shape_cast %75 : vector<8xf32> to vector<8x1xf32>
    %77 = tpu.reciprocal %76 {approx = true} : vector<8x1xf32> -> vector<8x1xf32>
    %78 = vector.broadcast %77 : vector<8x1xf32> to vector<8x8xf32>
    %79 = arith.mulf %74, %78 : vector<8x8xf32>
    %80 = arith.truncf %79 : vector<8x8xf32> to vector<8x8xbf16>
    %cst_29 = arith.constant dense<0.000000e+00> : vector<8x16xf32>
    %81 = tpu.matmul %80, %64, %cst_29 {dimension_numbers = #tpu.dot_dimension_numbers<[1], [0], [0], [1], [0, 0, 1, 1], [], []>} : vector<8x8xbf16>, vector<8x16xbf16>, vector<8x16xf32> -> vector<8x16xf32>
    %82 = arith.truncf %81 : vector<8x16xf32> to vector<8x16xbf16>
    %c16 = arith.constant 16 : index
    %c0_30 = arith.constant 0 : index
    %83 = vector.load %arg4[%c16, %c0_30] : memref<32x32xbf16, #tpu.memory_space<vmem>>, vector<16x32xbf16>
    %cst_31 = arith.constant dense<0.000000e+00> : vector<8x32xf32>
    %84 = tpu.matmul %82, %83, %cst_31 {dimension_numbers = #tpu.dot_dimension_numbers<[1], [0], [0], [1], [0, 0, 1, 1], [], []>} : vector<8x16xbf16>, vector<16x32xbf16>, vector<8x32xf32> -> vector<8x32xf32>
    %85 = arith.addf %58, %84 : vector<8x32xf32>
    %86 = arith.addf %11, %85 : vector<8x32xf32>
    %c1_32 = arith.constant 1 : index
    %c0_33 = arith.constant 0 : index
    %87 = vector.load %arg8[%c1_32, %c0_33] : memref<3x32xf32, #tpu.memory_space<vmem>>, vector<1x32xf32>
    %88 = arith.mulf %86, %86 : vector<8x32xf32>
    %cst_34 = arith.constant dense<0.000000e+00> : vector<8xf32>
    %89 = vector.multi_reduction <add>, %88, %cst_34 [1] : vector<8x32xf32> to vector<8xf32>
    %90 = vector.shape_cast %89 : vector<8xf32> to vector<8x1xf32>
    %cst_35 = arith.constant 3.200000e+01 : f32
    %91 = vector.broadcast %cst_35 : f32 to vector<8x1xf32>
    %92 = arith.divf %90, %91 : vector<8x1xf32>
    %cst_36 = arith.constant 9.99999997E-7 : f32
    %93 = vector.broadcast %cst_36 : f32 to vector<8x1xf32>
    %94 = arith.addf %92, %93 : vector<8x1xf32>
    %95 = math.rsqrt %94 : vector<8x1xf32>
    %96 = vector.broadcast %95 : vector<8x1xf32> to vector<8x32xf32>
    %97 = arith.mulf %86, %96 : vector<8x32xf32>
    %98 = vector.broadcast %87 : vector<1x32xf32> to vector<8x32xf32>
    %99 = arith.mulf %97, %98 : vector<8x32xf32>
    %100 = arith.truncf %99 : vector<8x32xf32> to vector<8x32xbf16>
    %c0_37 = arith.constant 0 : index
    %c0_38 = arith.constant 0 : index
    %101 = vector.load %arg5[%c0_37, %c0_38] : memref<32x128xbf16, #tpu.memory_space<vmem>>, vector<32x128xbf16>
    %cst_39 = arith.constant dense<0.000000e+00> : vector<8x128xf32>
    %102 = tpu.matmul %100, %101, %cst_39 {dimension_numbers = #tpu.dot_dimension_numbers<[1], [0], [0], [1], [0, 0, 1, 1], [], []>} : vector<8x32xbf16>, vector<32x128xbf16>, vector<8x128xf32> -> vector<8x128xf32>
    %103 = vector.extract_strided_slice %102 {offsets = [0, 0], sizes = [8, 64], strides = [1, 1]} : vector<8x128xf32> to vector<8x64xf32>
    %104 = vector.extract_strided_slice %102 {offsets = [0, 64], sizes = [8, 64], strides = [1, 1]} : vector<8x128xf32> to vector<8x64xf32>
    %105 = arith.negf %103 : vector<8x64xf32>
    %106 = math.exp %105 : vector<8x64xf32>
    %cst_40 = arith.constant 1.000000e+00 : f32
    %107 = vector.broadcast %cst_40 : f32 to vector<8x64xf32>
    %108 = arith.addf %107, %106 : vector<8x64xf32>
    %109 = arith.divf %107, %108 : vector<8x64xf32>
    %110 = arith.mulf %103, %109 : vector<8x64xf32>
    %111 = arith.mulf %110, %104 : vector<8x64xf32>
    %112 = arith.truncf %111 : vector<8x64xf32> to vector<8x64xbf16>
    %c0_41 = arith.constant 0 : index
    %c0_42 = arith.constant 0 : index
    %113 = vector.load %arg6[%c0_41, %c0_42] : memref<64x32xbf16, #tpu.memory_space<vmem>>, vector<64x32xbf16>
    %cst_43 = arith.constant dense<0.000000e+00> : vector<8x32xf32>
    %114 = tpu.matmul %112, %113, %cst_43 {dimension_numbers = #tpu.dot_dimension_numbers<[1], [0], [0], [1], [0, 0, 1, 1], [], []>} : vector<8x64xbf16>, vector<64x32xbf16>, vector<8x32xf32> -> vector<8x32xf32>
    %115 = arith.addf %86, %114 : vector<8x32xf32>
    %c2 = arith.constant 2 : index
    %c0_44 = arith.constant 0 : index
    %116 = vector.load %arg8[%c2, %c0_44] : memref<3x32xf32, #tpu.memory_space<vmem>>, vector<1x32xf32>
    %117 = arith.mulf %115, %115 : vector<8x32xf32>
    %cst_45 = arith.constant dense<0.000000e+00> : vector<8xf32>
    %118 = vector.multi_reduction <add>, %117, %cst_45 [1] : vector<8x32xf32> to vector<8xf32>
    %119 = vector.shape_cast %118 : vector<8xf32> to vector<8x1xf32>
    %cst_46 = arith.constant 3.200000e+01 : f32
    %120 = vector.broadcast %cst_46 : f32 to vector<8x1xf32>
    %121 = arith.divf %119, %120 : vector<8x1xf32>
    %cst_47 = arith.constant 9.99999997E-7 : f32
    %122 = vector.broadcast %cst_47 : f32 to vector<8x1xf32>
    %123 = arith.addf %121, %122 : vector<8x1xf32>
    %124 = math.rsqrt %123 : vector<8x1xf32>
    %125 = vector.broadcast %124 : vector<8x1xf32> to vector<8x32xf32>
    %126 = arith.mulf %115, %125 : vector<8x32xf32>
    %127 = vector.broadcast %116 : vector<1x32xf32> to vector<8x32xf32>
    %128 = arith.mulf %126, %127 : vector<8x32xf32>
    %129 = arith.truncf %128 : vector<8x32xf32> to vector<8x32xbf16>
    %c0_48 = arith.constant 0 : index
    %c0_49 = arith.constant 0 : index
    %130 = vector.load %arg7[%c0_48, %c0_49] : memref<32x128xbf16, #tpu.memory_space<vmem>>, vector<32x128xbf16>
    %cst_50 = arith.constant dense<0.000000e+00> : vector<8x128xf32>
    %131 = tpu.matmul %129, %130, %cst_50 {dimension_numbers = #tpu.dot_dimension_numbers<[1], [0], [0], [1], [0, 0, 1, 1], [], []>} : vector<8x32xbf16>, vector<32x128xbf16>, vector<8x128xf32> -> vector<8x128xf32>
    %c0_51 = arith.constant 0 : index
    %c0_52 = arith.constant 0 : index
    %c0_53 = arith.constant 0 : index
    %132 = vector.load %arg9[%c0_51, %c0_52, %c0_53] : memref<1x8x128xf32, #tpu.memory_space<vmem>>, vector<1x8x128xf32>
    %133 = vector.shape_cast %132 : vector<1x8x128xf32> to vector<8x128xf32>
    %134 = vector.shape_cast %131 : vector<8x128xf32> to vector<1x8x128xf32>
    tpu.vector_store %arg9[%c0_51, %c0_52, %c0_53], %134 {strides = array<i32>} : memref<1x8x128xf32, #tpu.memory_space<vmem>>, vector<1x8x128xf32>,
    %135 = tpu.iota {dimensions = array<i32: 1>} : vector<8x128xi32>
    %c64_i32 = arith.constant 64 : i32
    %136 = vector.broadcast %c64_i32 : i32 to vector<8x128xi32>
    %137 = arith.cmpi slt, %135, %136 : vector<8x128xi32>
    %cst_54 = arith.constant -1.000000e+30 : f32
    %138 = vector.broadcast %cst_54 : f32 to vector<8x128xf32>
    %139 = arith.select %137, %131, %138 : vector<8x128xi1>, vector<8x128xf32>
    %cst_55 = arith.constant dense<0xFF800000> : vector<8xf32>
    %140 = vector.multi_reduction <maximumf>, %139, %cst_55 [1] : vector<8x128xf32> to vector<8xf32>
    %141 = vector.shape_cast %140 : vector<8xf32> to vector<8x1xf32>
    %142 = vector.broadcast %141 : vector<8x1xf32> to vector<8x128xf32>
    %143 = arith.subf %139, %142 : vector<8x128xf32>
    %144 = math.exp %143 : vector<8x128xf32>
    %cst_56 = arith.constant dense<0.000000e+00> : vector<8xf32>
    %145 = vector.multi_reduction <add>, %144, %cst_56 [1] : vector<8x128xf32> to vector<8xf32>
    %146 = vector.shape_cast %145 : vector<8xf32> to vector<8x1xf32>
    %147 = math.log %146 : vector<8x1xf32>
    %148 = arith.addf %147, %141 : vector<8x1xf32>
    %149 = vector.broadcast %3 : vector<8x1xi32> to vector<8x128xi32>
    %150 = arith.cmpi eq, %135, %149 : vector<8x128xi32>
    %151 = arith.extui %150 : vector<8x128xi1> to vector<8x128xi32>
    %152 = arith.sitofp %151 : vector<8x128xi32> to vector<8x128xf32>
    %153 = arith.mulf %131, %152 : vector<8x128xf32>
    %cst_57 = arith.constant dense<0.000000e+00> : vector<8xf32>
    %154 = vector.multi_reduction <add>, %153, %cst_57 [1] : vector<8x128xf32> to vector<8xf32>
    %155 = vector.shape_cast %154 : vector<8xf32> to vector<8x1xf32>
    %156 = arith.subf %148, %155 : vector<8x1xf32>
    %157 = tpu.iota {dimensions = array<i32: 0>} : vector<8x1xi32>
    %c7_i32 = arith.constant 7 : i32
    %158 = vector.broadcast %c7_i32 : i32 to vector<8x1xi32>
    %159 = arith.cmpi ne, %157, %158 : vector<8x1xi32>
    %160 = arith.extui %159 : vector<8x1xi1> to vector<8x1xi32>
    %161 = arith.sitofp %160 : vector<8x1xi32> to vector<8x1xf32>
    %162 = arith.mulf %156, %161 : vector<8x1xf32>
    %cst_58 = arith.constant 0.0714285746 : f32
    %163 = vector.broadcast %cst_58 : f32 to vector<8x1xf32>
    %164 = arith.mulf %162, %163 : vector<8x1xf32>
    %c0_59 = arith.constant 0 : index
    %c0_60 = arith.constant 0 : index
    %c0_61 = arith.constant 0 : index
    %165 = vector.load %arg10[%c0_59, %c0_60, %c0_61] : memref<1x8x1xf32, #tpu.memory_space<vmem>>, vector<1x8x1xf32>
    %166 = vector.shape_cast %165 : vector<1x8x1xf32> to vector<8x1xf32>
    %167 = vector.shape_cast %164 : vector<8x1xf32> to vector<1x8x1xf32>
    tpu.vector_store %arg10[%c0_59, %c0_60, %c0_61], %167 {strides = array<i32>} : memref<1x8x1xf32, #tpu.memory_space<vmem>>, vector<1x8x1xf32>,
    return
  }
  func.func @transform_0(%arg0: i32) -> (i32, i32, i32) {
    %c0_i32 = arith.constant 0 : i32
    %c0_i32_0 = arith.constant 0 : i32
    %c0_i32_1 = arith.constant 0 : i32
    return %arg0, %c0_i32, %c0_i32_0 : i32, i32, i32
  }
  func.func @transform_1(%arg0: i32) -> (i32, i32) {
    %c0_i32 = arith.constant 0 : i32
    %c0_i32_0 = arith.constant 0 : i32
    %c0_i32_1 = arith.constant 0 : i32
    return %c0_i32, %c0_i32_0 : i32, i32
  }
  func.func @transform_2(%arg0: i32) -> (i32, i32) {
    %c0_i32 = arith.constant 0 : i32
    %c0_i32_0 = arith.constant 0 : i32
    %c0_i32_1 = arith.constant 0 : i32
    return %c0_i32, %c0_i32_0 : i32, i32
  }
  func.func @transform_3(%arg0: i32) -> (i32, i32) {
    %c0_i32 = arith.constant 0 : i32
    %c0_i32_0 = arith.constant 0 : i32
    %c0_i32_1 = arith.constant 0 : i32
    return %c0_i32, %c0_i32_0 : i32, i32
  }
  func.func @transform_4(%arg0: i32) -> (i32, i32) {
    %c0_i32 = arith.constant 0 : i32
    %c0_i32_0 = arith.constant 0 : i32
    %c0_i32_1 = arith.constant 0 : i32
    return %c0_i32, %c0_i32_0 : i32, i32
  }
  func.func @transform_5(%arg0: i32) -> (i32, i32) {
    %c0_i32 = arith.constant 0 : i32
    %c0_i32_0 = arith.constant 0 : i32
    %c0_i32_1 = arith.constant 0 : i32
    return %c0_i32, %c0_i32_0 : i32, i32
  }
  func.func @transform_6(%arg0: i32) -> (i32, i32) {
    %c0_i32 = arith.constant 0 : i32
    %c0_i32_0 = arith.constant 0 : i32
    %c0_i32_1 = arith.constant 0 : i32
    return %c0_i32, %c0_i32_0 : i32, i32
  }
  func.func @transform_7(%arg0: i32) -> (i32, i32) {
    %c0_i32 = arith.constant 0 : i32
    %c0_i32_0 = arith.constant 0 : i32
    %c0_i32_1 = arith.constant 0 : i32
    return %c0_i32, %c0_i32_0 : i32, i32
  }
  func.func @transform_8(%arg0: i32) -> (i32, i32, i32) {
    %c0_i32 = arith.constant 0 : i32
    %c0_i32_0 = arith.constant 0 : i32
    %c0_i32_1 = arith.constant 0 : i32
    return %arg0, %c0_i32, %c0_i32_0 : i32, i32, i32
  }
  func.func @transform_9(%arg0: i32) -> (i32, i32, i32) {
    %c0_i32 = arith.constant 0 : i32
    %c0_i32_0 = arith.constant 0 : i32
    %c0_i32_1 = arith.constant 0 : i32
    return %arg0, %c0_i32, %c0_i32_0 : i32, i32, i32
  }
}

</mosaic_0001>

<llo_original>
// kernel: forward.1
$region0: #{forward.1}
  #allocation0 [shape = 'u32[]', space=smem, size = 0x4, offset = 0x4, fixed_abs, tag = 'smem constant byte address 0x4 - core index']
  #allocation1 [shape = 'u32[72,128]{1,0:T(1,128)}', space=vmem, size = 0x9000, scoped, tag = 'internal scratch']
  %s0 = inlined_call_operand.vmem [shape: s32[2,8,2], index: 0, kind: input, shape index: {}]
  %s1 = inlined_call_operand.vmem [shape: bf16[64,32], index: 1, kind: input, shape index: {}]
  %s2 = inlined_call_operand.vmem [shape: bf16[32,96], index: 2, kind: input, shape index: {}]
  %s3 = inlined_call_operand.vmem [shape: bf16[32,32], index: 3, kind: input, shape index: {}]
  %s4 = inlined_call_operand.vmem [shape: bf16[32,128], index: 4, kind: input, shape index: {}]
  %s5 = inlined_call_operand.vmem [shape: bf16[64,32], index: 5, kind: input, shape index: {}]
  %s6 = inlined_call_operand.vmem [shape: bf16[32,128], index: 6, kind: input, shape index: {}]
  %s7 = inlined_call_operand.vmem [shape: f32[3,32], index: 7, kind: input, shape index: {}]
  %s8 = inlined_call_operand.hbm [shape: f32[2,8,128], index: 8, kind: output, shape index: {0}]
  %s9 = inlined_call_operand.vmem [shape: f32[2,8,1], index: 9, kind: output, shape index: {1}]
  %10 = xla_tuple %s8, %s9
  %s11 = sld [smem:[#allocation0]]
  $region73: #{forward.1} parent=0
    _
  %s13 = ssub.s32 1, %s11
  %s14 = scalar_select 0, %s13, %s11
  $region1: #{forward.1} parent=0
    #allocation2 [shape = 'u8[8192]{0}', space=vmem, size = 0x2000, scoped, tag = 'output window, operand 0']
    #allocation3 [shape = 's32[2]{0}', space=sflag, size = 0x8, scoped, tag = 'scoped memory for forward.1']
    %15 = vsyncpa [#allocation3], 0
    %s16 = scalar_lea.sflag [#allocation3], 1
    %17 = vsyncpa %s16, 0
    loop: start=0, step=1, limit=4
    $region2: #{forward.1} parent=1 // loop_pre_header
      _
    $region3: #{forward.1} parent=1 // loop_header
      %s19 = sphi 0, %s23
      %p20 = scmp.ge.s32.totalorder %s19, 4
      %s29 = sphi 0, %s31
      %s32 = sphi 0, %s29
      %s33 = sphi 0, %s32
      %s49 = sphi 0, %s33
      %s53 = sphi 0, %s53
      %s55 = sphi 0, %s53
      %s56 = sphi 0, %s55
      %s70 = sphi 0, %s56
      %s74 = sphi 0, %s74
      %s76 = sphi 0, %s74
      %s77 = sphi 0, %s76
      %s91 = sphi 0, %s77
      %s95 = sphi 0, %s95
      %s97 = sphi 0, %s95
      %s98 = sphi 0, %s97
      %s112 = sphi 0, %s98
      %s116 = sphi 0, %s116
      %s118 = sphi 0, %s116
      %s119 = sphi 0, %s118
      %s133 = sphi 0, %s119
      %s137 = sphi 0, %s137
      %s139 = sphi 0, %s137
      %s140 = sphi 0, %s139
      %s154 = sphi 0, %s140
      %s158 = sphi 0, %s158
      %s160 = sphi 0, %s158
      %s161 = sphi 0, %s160
      %s175 = sphi 0, %s161
      %s179 = sphi 0, %s179
      %s181 = sphi 0, %s179
      %s182 = sphi 0, %s181
      %s196 = sphi 0, %s182
      %s202 = sphi 0, %s204
      %s205 = sphi 0, %s202
      %s206 = sphi 0, %s205
      %s222 = sphi 0, %s206
      %s228 = sphi 0, %s230
      %s231 = sphi 0, %s228
      %s232 = sphi 0, %s231
      %s248 = sphi 0, %s232
    $region4: #{forward.1} parent=1 // loop_header_branch
      %22 = sbr.rel (%p20) target = $region8
    $region5: #{forward.1} parent=1 // loop_body
      %s24 = ssub.s32 %s19, 1
      %s25 = ssub.s32 %s19, 2
      %s26 = sadd.s32 %s19, 1
      %s27 = ssub.s32 %s19, %s26
      %p28 = scmp.eq.s32.totalorder %s27, 0
      %s30 = sadd.s32 %s29, 1
      %s31 = scalar_select %p28, %s29, %s30
      %p34 = pneg %p28
      %p35 = scmp.eq.s32.totalorder %s19, 1
      %p36 = por %p34, %p35
      %p37 = scmp.ne.s32.totalorder %s29, %s32
      %p38 = scmp.eq.s32.totalorder %s19, 0
      %p39 = por %p37, %p38
      %p40 = scmp.ne.s32.totalorder %s29, %s32
      %p41 = scmp.eq.s32.totalorder %s24, 1
      %p42 = por %p40, %p41
      %p43 = scmp.ne.s32.totalorder %s32, %s33
      %p44 = scmp.eq.s32.totalorder %s24, 0
      %p45 = por %p43, %p44
      %p46 = scmp.ne.s32.totalorder %s32, %s33
      %p47 = scmp.eq.s32.totalorder %s25, 1
      %p48 = por %p46, %p47
      %p50 = scmp.ne.s32.totalorder %s33, %s49
      %p51 = scmp.eq.s32.totalorder %s25, 0
      %p52 = por %p50, %p51
      %s54 = sadd.s32 %s53, 1
      %p57 = scmp.eq.s32.totalorder %s19, 1
      %p58 = scmp.ne.s32.totalorder %s53, %s55
      %p59 = scmp.eq.s32.totalorder %s19, 0
      %p60 = por %p58, %p59
      %p61 = scmp.ne.s32.totalorder %s53, %s55
      %p62 = scmp.eq.s32.totalorder %s24, 1
      %p63 = por %p61, %p62
      %p64 = scmp.ne.s32.totalorder %s55, %s56
      %p65 = scmp.eq.s32.totalorder %s24, 0
      %p66 = por %p64, %p65
      %p67 = scmp.ne.s32.totalorder %s55, %s56
      %p68 = scmp.eq.s32.totalorder %s25, 1
      %p69 = por %p67, %p68
      %p71 = scmp.ne.s32.totalorder %s56, %s70
      %p72 = scmp.eq.s32.totalorder %s25, 0
      %p73 = por %p71, %p72
      %s75 = sadd.s32 %s74, 1
      %p78 = scmp.eq.s32.totalorder %s19, 1
      %p79 = scmp.ne.s32.totalorder %s74, %s76
      %p80 = scmp.eq.s32.totalorder %s19, 0
      %p81 = por %p79, %p80
      %p82 = scmp.ne.s32.totalorder %s74, %s76
      %p83 = scmp.eq.s32.totalorder %s24, 1
      %p84 = por %p82, %p83
      %p85 = scmp.ne.s32.totalorder %s76, %s77
      %p86 = scmp.eq.s32.totalorder %s24, 0
      %p87 = por %p85, %p86
      %p88 = scmp.ne.s32.totalorder %s76, %s77
      %p89 = scmp.eq.s32.totalorder %s25, 1
      %p90 = por %p88, %p89
      %p92 = scmp.ne.s32.totalorder %s77, %s91
      %p93 = scmp.eq.s32.totalorder %s25, 0
      %p94 = por %p92, %p93
      %s96 = sadd.s32 %s95, 1
      %p99 = scmp.eq.s32.totalorder %s19, 1
      %p100 = scmp.ne.s32.totalorder %s95, %s97
      %p101 = scmp.eq.s32.totalorder %s19, 0
      %p102 = por %p100, %p101
      %p103 = scmp.ne.s32.totalorder %s95, %s97
      %p104 = scmp.eq.s32.totalorder %s24, 1
      %p105 = por %p103, %p104
      %p106 = scmp.ne.s32.totalorder %s97, %s98
      %p107 = scmp.eq.s32.totalorder %s24, 0
      %p108 = por %p106, %p107
      %p109 = scmp.ne.s32.totalorder %s97, %s98
      %p110 = scmp.eq.s32.totalorder %s25, 1
      %p111 = por %p109, %p110
      %p113 = scmp.ne.s32.totalorder %s98, %s112
      %p114 = scmp.eq.s32.totalorder %s25, 0
      %p115 = por %p113, %p114
      %s117 = sadd.s32 %s116, 1
      %p120 = scmp.eq.s32.totalorder %s19, 1
      %p121 = scmp.ne.s32.totalorder %s116, %s118
      %p122 = scmp.eq.s32.totalorder %s19, 0
      %p123 = por %p121, %p122
      %p124 = scmp.ne.s32.totalorder %s116, %s118
      %p125 = scmp.eq.s32.totalorder %s24, 1
      %p126 = por %p124, %p125
      %p127 = scmp.ne.s32.totalorder %s118, %s119
      %p128 = scmp.eq.s32.totalorder %s24, 0
      %p129 = por %p127, %p128
      %p130 = scmp.ne.s32.totalorder %s118, %s119
      %p131 = scmp.eq.s32.totalorder %s25, 1
      %p132 = por %p130, %p131
      %p134 = scmp.ne.s32.totalorder %s119, %s133
      %p135 = scmp.eq.s32.totalorder %s25, 0
      %p136 = por %p134, %p135
      %s138 = sadd.s32 %s137, 1
      %p141 = scmp.eq.s32.totalorder %s19, 1
      %p142 = scmp.ne.s32.totalorder %s137, %s139
      %p143 = scmp.eq.s32.totalorder %s19, 0
      %p144 = por %p142, %p143
      %p145 = scmp.ne.s32.totalorder %s137, %s139
      %p146 = scmp.eq.s32.totalorder %s24, 1
      %p147 = por %p145, %p146
      %p148 = scmp.ne.s32.totalorder %s139, %s140
      %p149 = scmp.eq.s32.totalorder %s24, 0
      %p150 = por %p148, %p149
      %p151 = scmp.ne.s32.totalorder %s139, %s140
      %p152 = scmp.eq.s32.totalorder %s25, 1
      %p153 = por %p151, %p152
      %p155 = scmp.ne.s32.totalorder %s140, %s154
      %p156 = scmp.eq.s32.totalorder %s25, 0
      %p157 = por %p155, %p156
      %s159 = sadd.s32 %s158, 1
      %p162 = scmp.eq.s32.totalorder %s19, 1
      %p163 = scmp.ne.s32.totalorder %s158, %s160
      %p164 = scmp.eq.s32.totalorder %s19, 0
      %p165 = por %p163, %p164
      %p166 = scmp.ne.s32.totalorder %s158, %s160
      %p167 = scmp.eq.s32.totalorder %s24, 1
      %p168 = por %p166, %p167
      %p169 = scmp.ne.s32.totalorder %s160, %s161
      %p170 = scmp.eq.s32.totalorder %s24, 0
      %p171 = por %p169, %p170
      %p172 = scmp.ne.s32.totalorder %s160, %s161
      %p173 = scmp.eq.s32.totalorder %s25, 1
      %p174 = por %p172, %p173
      %p176 = scmp.ne.s32.totalorder %s161, %s175
      %p177 = scmp.eq.s32.totalorder %s25, 0
      %p178 = por %p176, %p177
      %s180 = sadd.s32 %s179, 1
      %p183 = scmp.eq.s32.totalorder %s19, 1
      %p184 = scmp.ne.s32.totalorder %s179, %s181
      %p185 = scmp.eq.s32.totalorder %s19, 0
      %p186 = por %p184, %p185
      %p187 = scmp.ne.s32.totalorder %s179, %s181
      %p188 = scmp.eq.s32.totalorder %s24, 1
      %p189 = por %p187, %p188
      %p190 = scmp.ne.s32.totalorder %s181, %s182
      %p191 = scmp.eq.s32.totalorder %s24, 0
      %p192 = por %p190, %p191
      %p193 = scmp.ne.s32.totalorder %s181, %s182
      %p194 = scmp.eq.s32.totalorder %s25, 1
      %p195 = por %p193, %p194
      %p197 = scmp.ne.s32.totalorder %s182, %s196
      %p198 = scmp.eq.s32.totalorder %s25, 0
      %p199 = por %p197, %p198
      %s200 = ssub.s32 %s19, %s26
      %p201 = scmp.eq.s32.totalorder %s200, 0
      %s203 = sadd.s32 %s202, 1
      %s204 = scalar_select %p201, %s202, %s203
      %p207 = pneg %p201
      %p208 = scmp.eq.s32.totalorder %s19, 1
      %p209 = por %p207, %p208
      %p210 = scmp.ne.s32.totalorder %s202, %s205
      %p211 = scmp.eq.s32.totalorder %s19, 0
      %p212 = por %p210, %p211
      %p213 = scmp.ne.s32.totalorder %s202, %s205
      %p214 = scmp.eq.s32.totalorder %s24, 1
      %p215 = por %p213, %p214
      %p216 = scmp.ne.s32.totalorder %s205, %s206
      %p217 = scmp.eq.s32.totalorder %s24, 0
      %p218 = por %p216, %p217
      %p219 = scmp.ne.s32.totalorder %s205, %s206
      %p220 = scmp.eq.s32.totalorder %s25, 1
      %p221 = por %p219, %p220
      %p223 = scmp.ne.s32.totalorder %s206, %s222
      %p224 = scmp.eq.s32.totalorder %s25, 0
      %p225 = por %p223, %p224
      %s226 = ssub.s32 %s19, %s26
      %p227 = scmp.eq.s32.totalorder %s226, 0
      %s229 = sadd.s32 %s228, 1
      %s230 = scalar_select %p227, %s228, %s229
      %p233 = pneg %p227
      %p234 = scmp.eq.s32.totalorder %s19, 1
      %p235 = por %p233, %p234
      %p236 = scmp.ne.s32.totalorder %s228, %s231
      %p237 = scmp.eq.s32.totalorder %s19, 0
      %p238 = por %p236, %p237
      %p239 = scmp.ne.s32.totalorder %s228, %s231
      %p240 = scmp.eq.s32.totalorder %s24, 1
      %p241 = por %p239, %p240
      %p242 = scmp.ne.s32.totalorder %s231, %s232
      %p243 = scmp.eq.s32.totalorder %s24, 0
      %p244 = por %p242, %p243
      %p245 = scmp.ne.s32.totalorder %s231, %s232
      %p246 = scmp.eq.s32.totalorder %s25, 1
      %p247 = por %p245, %p246
      %p249 = scmp.ne.s32.totalorder %s232, %s248
      %p250 = scmp.eq.s32.totalorder %s25, 0
      %p251 = por %p249, %p250
      %p252 = scmp.le.s32.totalorder 1, %s19
      %p253 = scmp.lt.s32.totalorder %s19, 3
      %p254 = pnand %p252, %p253
      %p255 = pneg %p254
      // Predicated region
      $region9: #{forward.1} parent=5 // pred_check
        _
      $region10: #{forward.1} parent=5 // pred_check_branch
        %257 = sbr.rel (%p254) target = $region12
      $region11: #{forward.1} parent=5 // pred_region
        %s258 = ssub.s32 %s19, 1
        // Predicated region
        $region13: #{forward.1} parent=11 // pred_check
          %p259 = pneg %p66
        $region14: #{forward.1} parent=11 // pred_check_branch
          %261 = sbr.rel (%p259) target = $region16
        $region15: #{forward.1} parent=11 // pred_region
          _
        $region16: #{forward.1} parent=11 // pred_fallthru
          _
        // Predicated region
        $region17: #{forward.1} parent=11 // pred_check
          %p262 = pneg %p87
        $region18: #{forward.1} parent=11 // pred_check_branch
          %264 = sbr.rel (%p262) target = $region20
        $region19: #{forward.1} parent=11 // pred_region
          _
        $region20: #{forward.1} parent=11 // pred_fallthru
          _
        // Predicated region
        $region21: #{forward.1} parent=11 // pred_check
          %p265 = pneg %p108
        $region22: #{forward.1} parent=11 // pred_check_branch
          %267 = sbr.rel (%p265) target = $region24
        $region23: #{forward.1} parent=11 // pred_region
          _
        $region24: #{forward.1} parent=11 // pred_fallthru
          _
        // Predicated region
        $region25: #{forward.1} parent=11 // pred_check
          %p268 = pneg %p129
        $region26: #{forward.1} parent=11 // pred_check_branch
          %270 = sbr.rel (%p268) target = $region28
        $region27: #{forward.1} parent=11 // pred_region
          _
        $region28: #{forward.1} parent=11 // pred_fallthru
          _
        // Predicated region
        $region29: #{forward.1} parent=11 // pred_check
          %p271 = pneg %p150
        $region30: #{forward.1} parent=11 // pred_check_branch
          %273 = sbr.rel (%p271) target = $region32
        $region31: #{forward.1} parent=11 // pred_region
          _
        $region32: #{forward.1} parent=11 // pred_fallthru
          _
        // Predicated region
        $region33: #{forward.1} parent=11 // pred_check
          %p274 = pneg %p171
        $region34: #{forward.1} parent=11 // pred_check_branch
          %276 = sbr.rel (%p274) target = $region36
        $region35: #{forward.1} parent=11 // pred_region
          _
        $region36: #{forward.1} parent=11 // pred_fallthru
          _
        // Predicated region
        $region37: #{forward.1} parent=11 // pred_check
          %p277 = pneg %p192
        $region38: #{forward.1} parent=11 // pred_check_branch
          %279 = sbr.rel (%p277) target = $region40
        $region39: #{forward.1} parent=11 // pred_region
          _
        $region40: #{forward.1} parent=11 // pred_fallthru
          _
      $region12: #{forward.1} parent=5 // pred_fallthru
        _
      %p280 = scmp.lt.s32.totalorder %s19, 2
      // Predicated region
      $region41: #{forward.1} parent=5 // pred_check
        %p281 = pneg %p280
      $region42: #{forward.1} parent=5 // pred_check_branch
        %283 = sbr.rel (%p281) target = $region44
      $region43: #{forward.1} parent=5 // pred_region
        // Predicated region
        $region45: #{forward.1} parent=43 // pred_check
          %p284 = pneg %p39
        $region46: #{forward.1} parent=43 // pred_check_branch
          %286 = sbr.rel (%p284) target = $region48
        $region47: #{forward.1} parent=43 // pred_region
          %p287 = scmp.lt.s32.totalorder %s19, 1
          %s288 = scalar_select %p287, %s19, 1
          %s289 = smul.addr %s288, 8
          %s290 = scalar_lea.vmem %s0, %s289
        $region48: #{forward.1} parent=43 // pred_fallthru
          _
      $region44: #{forward.1} parent=5 // pred_fallthru
        _
      %p291 = scmp.le.s32.totalorder 1, %s19
      %p292 = scmp.lt.s32.totalorder %s19, 3
      %p293 = pnand %p291, %p292
      %p294 = pneg %p293
      // Predicated region
      $region49: #{forward.1} parent=5 // pred_check
        _
      $region50: #{forward.1} parent=5 // pred_check_branch
        %296 = sbr.rel (%p293) target = $region52
      $region51: #{forward.1} parent=5 // pred_region
        %s297 = ssub.s32 %s19, 1
        %p298 = scmp.lt.s32.totalorder %s24, 1
        %s299 = scalar_select %p298, %s24, 1
        %s300 = smul.addr %s299, 8
        %s301 = scalar_lea.vmem %s0, %s300
        %p302 = pneg %p45
        %p303 = pneg %p42
        %p304 = pneg %p66
        %p305 = pneg %p63
        %p306 = pneg %p87
        %p307 = pneg %p84
        %p308 = pneg %p108
        %p309 = pneg %p105
        %p310 = pneg %p129
        %p311 = pneg %p126
        %p312 = pneg %p150
        %p313 = pneg %p147
        %p314 = pneg %p171
        %p315 = pneg %p168
        %p316 = pneg %p192
        %p317 = pneg %p189
        %p318 = pneg %p218
        %p319 = pneg %p215
        %s320 = sand.u32 %s205, 1
        %s321 = scalar_lea.sflag [#allocation3], %s320
        %s322 = sand.u32 %s205, 1
        %s323 = smul.addr %s322, 8
        %s324 = scalar_lea.vmem [#allocation2], %s323
        %p325 = pneg %p244
        %p326 = pneg %p241
        %p327 = scmp.lt.s32.totalorder %s24, 1
        %s328 = scalar_select %p327, %s24, 1
        %s329 = smul.addr %s328, 8
        %s330 = scalar_lea.vmem %s9, %s329
        %p331 = scmp.lt.s32.totalorder %s24, 1
        %s332 = scalar_select %p331, %s24, 1
        %s333 = smul.addr %s332, 8
        %s334 = scalar_lea.vmem %s0, %s333
        %p335 = scmp.lt.s32.totalorder %s24, 1
        %s336 = scalar_select %p335, %s24, 1
        %s337 = smul.addr %s336, 8
        %s338 = scalar_lea.vmem %s9, %s337
        %v340 = vld [vmem:[%s334] sm:$0xff]
        %v341 = vlaneseq
        %v342 = vand.u32 %v341, 127
        %343 = vset.pattern.permute.xlu0 0
        %344 = vperm.xlu0 %343, %v340
        %v345 = vpop.permute.xlu0 %344
        %vm346 = vcmp.eq.s32.totalorder %v342, %v345
        %v347 = vsel %vm346, 1, 0
        %v348 = vcvt.s32.f32 %v347
        %v349 = vpack.c.bf16 %v348, %v348
        %v350 = vld [vmem:[%s1] sm:$0xf]
        %v351 = vld [vmem:[%s1 + $0x4] sm:$0xf]
        %v352 = vld [vmem:[%s1 + $0x8] sm:$0xf]
        %v353 = vld [vmem:[%s1 + $0xc] sm:$0xf]
        %v354 = vld [vmem:[%s1 + $0x10] sm:$0xf]
        %v355 = vld [vmem:[%s1 + $0x14] sm:$0xf]
        %v356 = vld [vmem:[%s1 + $0x18] sm:$0xf]
        %v357 = vld [vmem:[%s1 + $0x1c] sm:$0xf]
        %v366 = vunpack.c.l.b16 %v350
        %v367 = vunpack.c.l.b16 %v351
        %v368 = vunpack.c.l.b16 %v352
        %v369 = vunpack.c.l.b16 %v353
        %v370 = vunpack.c.l.b16 %v354
        %v371 = vunpack.c.l.b16 %v355
        %v372 = vunpack.c.l.b16 %v356
        %v373 = vunpack.c.l.b16 %v357
        %v374 = vpack.c.b16 %v367, %v366
        %v375 = vpack.c.b16 %v369, %v368
        %v376 = vpack.c.b16 %v371, %v370
        %v377 = vpack.c.b16 %v373, %v372
        %vm382 = vcmask 523264
        %v384 = vsel %vm382, %v349, 0
        %386 = vmatpush.bf16.msra.mxu0 0
        %387 = vmatpush.bf16.msra.mxu0 0
        %388 = vmatpush.bf16.msra.mxu0 0
        %389 = vmatpush.bf16.msra.mxu0 0
        %390 = vmatpush.bf16.msra.mxu0 %v377
        %391 = vmatpush.bf16.msra.mxu0 %v376
        %392 = vmatpush.bf16.msra.mxu0 %v375
        %393 = vmatpush.bf16.msra.mxu0 %v374
        %394 = vmatmul.bf16.gmra.mxu0 %v384
        %v395 = vpop.f32.mrf.mxu0
        %v396 = vadd.f32 0.0, %v395
        %v397 = vpop.f32.mrf.mxu0
        %398 = vdwg.mxu0
        %v399 = vld [vmem:[%s7] sm:$0x1]
        %v400 = vmul.f32 %v396, %v396
        %vm401 = vcmask 261120
        %v402 = vsel %vm401, %v400, 0.0
        %403 = vadd.xlane.f32.xlu0 %v402
        %v404 = vpop.xlane.xlu0 %403
        %v405 = vrcp.pop 32.0
        %v406 = vmul.f32 32.0, %v405
        %v407 = vsub.f32 1.0, %v406
        %v408 = vmul.f32 %v405, %v407
        %v409 = vadd.f32 %v405, %v408
        %vm410 = vweird.f32 %v405
        %v411 = vsel %vm410, %v405, %v409
        %v412 = vmul.f32 %v404, %v411
        %v413 = vadd.f32 %v412, 1e-06
        %v414 = vrsqrt.pop %v413
        %v415 = vmul.f32 %v414, %v413
        %v416 = vmul.f32 %v415, %v414
        %v417 = vmul.f32 0.5, %v416
        %v418 = vsub.f32 1.5, %v417
        %v419 = vmul.f32 %v414, %v418
        %vm420 = vweird.f32 %v413
        %vm421 = vweird.f32 %v414
        %vm422 = vmor %vm420, %vm421
        %v423 = vsel %vm422, %v414, %v419
        %v424 = vmul.f32 %v396, %v423
        %v425 = vperm.slane %v399, 0
        %v426 = vmul.f32 %v424, %v425
        %v427 = vpack.c.bf16 %v426, %v426
        %v428 = vld [vmem:[%s2] sm:$0xf]
        %v429 = vld [vmem:[%s2 + $0x4] sm:$0xf]
        %v430 = vld [vmem:[%s2 + $0x8] sm:$0xf]
        %v431 = vld [vmem:[%s2 + $0xc] sm:$0xf]
        %v436 = vunpack.c.l.b16 %v428
        %v437 = vunpack.c.l.b16 %v429
        %v438 = vunpack.c.l.b16 %v430
        %v439 = vunpack.c.l.b16 %v431
        %v440 = vpack.c.b16 %v437, %v436
        %v441 = vpack.c.b16 %v439, %v438
        %v445 = vsel %vm401, %v427, 0
        %447 = vmatpush.bf16.msra.mxu0 0
        %448 = vmatpush.bf16.msra.mxu0 0
        %449 = vmatpush.bf16.msra.mxu0 0
        %450 = vmatpush.bf16.msra.mxu0 0
        %451 = vmatpush.bf16.msra.mxu0 0
        %452 = vmatpush.bf16.msra.mxu0 0
        %453 = vmatpush.bf16.msra.mxu0 %v441
        %454 = vmatpush.bf16.msra.mxu0 %v440
        %455 = vmatmul.bf16.gmra.mxu0 %v445
        %v456 = vpop.f32.mrf.mxu0
        %v457 = vadd.f32 0.0, %v456
        %v458 = vpop.f32.mrf.mxu0
        %459 = vdwg.mxu0
        %v460 = vlaneseq
        %v461 = vshrl.u32 %v460, 7
        %vm462 = vcmp.le.s32.totalorder %v342, %v461
        %v463 = vpack.c.bf16 %v457, %v457
        %465 = vrot.lane.b32.xlu0 %v463, 96
        %v466 = vpop.permute.xlu0 %465
        %vm467 = vcmask 130048
        %v469 = vsel %vm467, %v463, 0
        %v472 = vsel %vm467, %v466, 0
        %474 = vmatpush.bf16.xpose.msra.mxu0 0
        %475 = vmatpush.bf16.xpose.msra.mxu0 0
        %476 = vmatpush.bf16.xpose.msra.mxu0 0
        %477 = vmatpush.bf16.xpose.msra.mxu0 0
        %478 = vmatpush.bf16.xpose.msra.mxu0 0
        %479 = vmatpush.bf16.xpose.msra.mxu0 0
        %480 = vmatpush.bf16.xpose.msra.mxu0 0
        %481 = vmatpush.bf16.xpose.msra.mxu0 %v472
        %482 = vmatmul.bf16.gmra.mxu0 %v469
        %v483 = vpop.f32.mrf.mxu0
        %v484 = vadd.f32 0.0, %v483
        %v485 = vpop.f32.mrf.mxu0
        %486 = vdwg.mxu0
        %v487 = vmul.f32 %v484, 0.25
        %v488 = vsel %vm462, %v487, -1e+30
        %vm489 = vcmask 64512
        %v490 = vsel %vm489, %v488, -inf
        %491 = vmax.xlane.f32.xlu0 %v490
        %v492 = vpop.xlane.xlu0 %491
        %v493 = vsub.f32 %v488, %v492
        %v494 = vmul.f32 %v493, 1.442695
        %v495 = vpow.pop %v494
        %v496 = vsel %vm489, %v495, 0.0
        %497 = vadd.xlane.f32.xlu0 %v496
        %v498 = vpop.xlane.xlu0 %497
        %v499 = vrcp.pop %v498
        %v500 = vmul.f32 %v495, %v499
        %v501 = vpack.c.bf16 %v500, %v500
        %502 = vrot.lane.b32.xlu0 %v463, 64
        %v503 = vpop.permute.xlu0 %502
        %v505 = vsel %vm489, %v501, 0
        %vm507 = vcmask 1043456
        %v509 = vsel %vm507, %v503, 0
        %511 = vmatpush.bf16.msra.mxu0 0
        %512 = vmatpush.bf16.msra.mxu0 0
        %513 = vmatpush.bf16.msra.mxu0 0
        %514 = vmatpush.bf16.msra.mxu0 0
        %515 = vmatpush.bf16.msra.mxu0 0
        %516 = vmatpush.bf16.msra.mxu0 0
        %517 = vmatpush.bf16.msra.mxu0 0
        %518 = vmatpush.bf16.msra.mxu0 %v509
        %519 = vmatmul.bf16.gmra.mxu0 %v505
        %v520 = vpop.f32.mrf.mxu0
        %v521 = vadd.f32 0.0, %v520
        %v522 = vpop.f32.mrf.mxu0
        %523 = vdwg.mxu0
        %v524 = vpack.c.bf16 %v521, %v521
        %v525 = vld [vmem:[%s3] sm:$0xf]
        %v526 = vld [vmem:[%s3 + $0x4] sm:$0xf]
        %527 = vrot.lane.b32.xlu0 %v463, 112
        %v528 = vpop.permute.xlu0 %527
        %529 = vrot.lane.b32.xlu0 %v463, 80
        %v530 = vpop.permute.xlu0 %529
        %v532 = vsel %vm467, %v528, 0
        %v535 = vsel %vm467, %v530, 0
        %537 = vmatpush.bf16.xpose.msra.mxu0 0
        %538 = vmatpush.bf16.xpose.msra.mxu0 0
        %539 = vmatpush.bf16.xpose.msra.mxu0 0
        %540 = vmatpush.bf16.xpose.msra.mxu0 0
        %541 = vmatpush.bf16.xpose.msra.mxu0 0
        %542 = vmatpush.bf16.xpose.msra.mxu0 0
        %543 = vmatpush.bf16.xpose.msra.mxu0 0
        %544 = vmatpush.bf16.xpose.msra.mxu0 %v535
        %545 = vmatmul.bf16.gmra.mxu0 %v532
        %v546 = vpop.f32.mrf.mxu0
        %v547 = vadd.f32 0.0, %v546
        %v548 = vpop.f32.mrf.mxu0
        %549 = vdwg.mxu0
        %v550 = vmul.f32 %v547, 0.25
        %v551 = vsel %vm462, %v550, -1e+30
        %v552 = vsel %vm489, %v551, -inf
        %553 = vmax.xlane.f32.xlu0 %v552
        %v554 = vpop.xlane.xlu0 %553
        %v555 = vsub.f32 %v551, %v554
        %v556 = vmul.f32 %v555, 1.442695
        %v557 = vpow.pop %v556
        %v558 = vsel %vm489, %v557, 0.0
        %559 = vadd.xlane.f32.xlu0 %v558
        %v560 = vpop.xlane.xlu0 %559
        %v561 = vrcp.pop %v560
        %v562 = vmul.f32 %v557, %v561
        %v563 = vpack.c.bf16 %v562, %v562
        %564 = vrot.lane.b32.xlu0 %v463, 48
        %v565 = vpop.permute.xlu0 %564
        %v567 = vsel %vm489, %v563, 0
        %v570 = vsel %vm507, %v565, 0
        %572 = vmatpush.bf16.msra.mxu0 0
        %573 = vmatpush.bf16.msra.mxu0 0
        %574 = vmatpush.bf16.msra.mxu0 0
        %575 = vmatpush.bf16.msra.mxu0 0
        %576 = vmatpush.bf16.msra.mxu0 0
        %577 = vmatpush.bf16.msra.mxu0 0
        %578 = vmatpush.bf16.msra.mxu0 0
        %579 = vmatpush.bf16.msra.mxu0 %v570
        %580 = vmatmul.bf16.gmra.mxu0 %v567
        %v581 = vpop.f32.mrf.mxu0
        %v582 = vadd.f32 0.0, %v581
        %v583 = vpop.f32.mrf.mxu0
        %584 = vdwg.mxu0
        %v585 = vpack.c.bf16 %v582, %v582
        %v586 = vld [vmem:[%s3 + $0x8] sm:$0xf]
        %v587 = vld [vmem:[%s3 + $0xc] sm:$0xf]
        %v590 = vunpack.c.l.b16 %v586
        %v591 = vunpack.c.l.b16 %v587
        %v592 = vpack.c.b16 %v591, %v590
        %v595 = vsel %vm467, %v585, 0
        %597 = vmatpush.bf16.msra.mxu0 0
        %598 = vmatpush.bf16.msra.mxu0 0
        %599 = vmatpush.bf16.msra.mxu0 0
        %600 = vmatpush.bf16.msra.mxu0 0
        %601 = vmatpush.bf16.msra.mxu0 0
        %602 = vmatpush.bf16.msra.mxu0 0
        %603 = vmatpush.bf16.msra.mxu0 0
        %604 = vmatpush.bf16.msra.mxu0 %v592
        %605 = vmatmul.bf16.gmra.mxu0 %v595
        %v606 = vpop.f32.mrf.mxu0
        %v607 = vadd.f32 0.0, %v606
        %v608 = vpop.f32.mrf.mxu0
        %609 = vdwg.mxu0
        %v612 = vunpack.c.l.b16 %v525
        %v613 = vunpack.c.l.b16 %v526
        %v614 = vpack.c.b16 %v613, %v612
        %v617 = vsel %vm467, %v524, 0
        %619 = vmatpush.bf16.msra.mxu0 0
        %620 = vmatpush.bf16.msra.mxu0 0
        %621 = vmatpush.bf16.msra.mxu0 0
        %622 = vmatpush.bf16.msra.mxu0 0
        %623 = vmatpush.bf16.msra.mxu0 0
        %624 = vmatpush.bf16.msra.mxu0 0
        %625 = vmatpush.bf16.msra.mxu0 0
        %626 = vmatpush.bf16.msra.mxu0 %v614
        %627 = vmatmul.bf16.gmra.mxu0 %v617
        %v628 = vpop.f32.mrf.mxu0
        %v629 = vadd.f32 %v607, %v628
        %v630 = vpop.f32.mrf.mxu0
        %631 = vdwg.mxu0
        %v632 = vadd.f32 %v396, %v629
        %v633 = vld [vmem:[%s7 + $0x1] sm:$0x1]
        %v634 = vmul.f32 %v632, %v632
        %v635 = vsel %vm401, %v634, 0.0
        %636 = vadd.xlane.f32.xlu0 %v635
        %v637 = vpop.xlane.xlu0 %636
        %v638 = vmul.f32 %v637, %v411
        %v639 = vadd.f32 %v638, 1e-06
        %v640 = vrsqrt.pop %v639
        %v641 = vmul.f32 %v640, %v639
        %v642 = vmul.f32 %v641, %v640
        %v643 = vmul.f32 0.5, %v642
        %v644 = vsub.f32 1.5, %v643
        %v645 = vmul.f32 %v640, %v644
        %vm646 = vweird.f32 %v639
        %vm647 = vweird.f32 %v640
        %vm648 = vmor %vm646, %vm647
        %v649 = vsel %vm648, %v640, %v645
        %v650 = vmul.f32 %v632, %v649
        %v651 = vperm.slane %v633, 0
        %v652 = vmul.f32 %v650, %v651
        %v653 = vpack.c.bf16 %v652, %v652
        %v654 = vld [vmem:[%s4] sm:$0xf]
        %v655 = vld [vmem:[%s4 + $0x4] sm:$0xf]
        %v656 = vld [vmem:[%s4 + $0x8] sm:$0xf]
        %v657 = vld [vmem:[%s4 + $0xc] sm:$0xf]
        %v662 = vunpack.c.l.b16 %v654
        %v663 = vunpack.c.l.b16 %v655
        %v664 = vunpack.c.l.b16 %v656
        %v665 = vunpack.c.l.b16 %v657
        %v666 = vpack.c.b16 %v663, %v662
        %v667 = vpack.c.b16 %v665, %v664
        %v671 = vsel %vm401, %v653, 0
        %673 = vmatpush.bf16.msra.mxu0 0
        %674 = vmatpush.bf16.msra.mxu0 0
        %675 = vmatpush.bf16.msra.mxu0 0
        %676 = vmatpush.bf16.msra.mxu0 0
        %677 = vmatpush.bf16.msra.mxu0 0
        %678 = vmatpush.bf16.msra.mxu0 0
        %679 = vmatpush.bf16.msra.mxu0 %v667
        %680 = vmatpush.bf16.msra.mxu0 %v666
        %681 = vmatmul.bf16.gmra.mxu0 %v671
        %v682 = vpop.f32.mrf.mxu0
        %v683 = vadd.f32 0.0, %v682
        %v684 = vpop.f32.mrf.mxu0
        %685 = vdwg.mxu0
        %v686 = vxor.u32 %v683, 2147483648
        %v687 = vmul.f32 %v686, 1.442695
        %v688 = vpow.pop %v687
        %v689 = vadd.f32 %v688, 1.0
        %v690 = vrcp.pop %v689
        %v691 = vmul.f32 %v689, %v690
        %v692 = vsub.f32 1.0, %v691
        %v693 = vmul.f32 %v690, %v692
        %v694 = vadd.f32 %v690, %v693
        %vm695 = vweird.f32 %v689
        %vm696 = vweird.f32 %v690
        %vm697 = vmor %vm695, %vm696
        %v698 = vsel %vm697, %v690, %v694
        %v699 = vand.u32 2147483647, %v689
        %vm700 = vcmp.eq.f32.partialorder %v699, 8.507059e+37
        %v701 = vand.u32 %v689, 2147483648
        %v702 = vor.u32 1.1754944e-38, %v701
        %v703 = vsel %vm700, %v702, %v698
        %v704 = vmul.f32 1.0, %v703
        %v705 = vmul.f32 %v683, %v704
        %707 = vrot.lane.b32.xlu0 %v683, 64
        %v708 = vpop.permute.xlu0 %707
        %v710 = vmul.f32 %v705, %v708
        %v711 = vpack.c.bf16 %v710, %v710
        %v712 = vld [vmem:[%s5] sm:$0xf]
        %v713 = vld [vmem:[%s5 + $0x4] sm:$0xf]
        %v714 = vld [vmem:[%s5 + $0x8] sm:$0xf]
        %v715 = vld [vmem:[%s5 + $0xc] sm:$0xf]
        %v716 = vld [vmem:[%s5 + $0x10] sm:$0xf]
        %v717 = vld [vmem:[%s5 + $0x14] sm:$0xf]
        %v718 = vld [vmem:[%s5 + $0x18] sm:$0xf]
        %v719 = vld [vmem:[%s5 + $0x1c] sm:$0xf]
        %v728 = vunpack.c.l.b16 %v712
        %v729 = vunpack.c.l.b16 %v713
        %v730 = vunpack.c.l.b16 %v714
        %v731 = vunpack.c.l.b16 %v715
        %v732 = vunpack.c.l.b16 %v716
        %v733 = vunpack.c.l.b16 %v717
        %v734 = vunpack.c.l.b16 %v718
        %v735 = vunpack.c.l.b16 %v719
        %v736 = vpack.c.b16 %v729, %v728
        %v737 = vpack.c.b16 %v731, %v730
        %v738 = vpack.c.b16 %v733, %v732
        %v739 = vpack.c.b16 %v735, %v734
        %v745 = vsel %vm382, %v711, 0
        %747 = vmatpush.bf16.msra.mxu0 0
        %748 = vmatpush.bf16.msra.mxu0 0
        %749 = vmatpush.bf16.msra.mxu0 0
        %750 = vmatpush.bf16.msra.mxu0 0
        %751 = vmatpush.bf16.msra.mxu0 %v739
        %752 = vmatpush.bf16.msra.mxu0 %v738
        %753 = vmatpush.bf16.msra.mxu0 %v737
        %754 = vmatpush.bf16.msra.mxu0 %v736
        %755 = vmatmul.bf16.gmra.mxu0 %v745
        %v756 = vpop.f32.mrf.mxu0
        %v757 = vadd.f32 0.0, %v756
        %v758 = vpop.f32.mrf.mxu0
        %759 = vdwg.mxu0
        %v760 = vadd.f32 %v632, %v757
        %v761 = vld [vmem:[%s7 + $0x2] sm:$0x1]
        %v762 = vmul.f32 %v760, %v760
        %v763 = vsel %vm401, %v762, 0.0
        %764 = vadd.xlane.f32.xlu0 %v763
        %v765 = vpop.xlane.xlu0 %764
        %v766 = vmul.f32 %v765, %v411
        %v767 = vadd.f32 %v766, 1e-06
        %v768 = vrsqrt.pop %v767
        %v769 = vmul.f32 %v768, %v767
        %v770 = vmul.f32 %v769, %v768
        %v771 = vmul.f32 0.5, %v770
        %v772 = vsub.f32 1.5, %v771
        %v773 = vmul.f32 %v768, %v772
        %vm774 = vweird.f32 %v767
        %vm775 = vweird.f32 %v768
        %vm776 = vmor %vm774, %vm775
        %v777 = vsel %vm776, %v768, %v773
        %v778 = vmul.f32 %v760, %v777
        %v779 = vperm.slane %v761, 0
        %v780 = vmul.f32 %v778, %v779
        %v781 = vpack.c.bf16 %v780, %v780
        %v782 = vld [vmem:[%s6] sm:$0xf]
        %v783 = vld [vmem:[%s6 + $0x4] sm:$0xf]
        %v784 = vld [vmem:[%s6 + $0x8] sm:$0xf]
        %v785 = vld [vmem:[%s6 + $0xc] sm:$0xf]
        %v790 = vunpack.c.l.b16 %v782
        %v791 = vunpack.c.l.b16 %v783
        %v792 = vunpack.c.l.b16 %v784
        %v793 = vunpack.c.l.b16 %v785
        %v794 = vpack.c.b16 %v791, %v790
        %v795 = vpack.c.b16 %v793, %v792
        %v799 = vsel %vm401, %v781, 0
        %801 = vmatpush.bf16.msra.mxu0 0
        %802 = vmatpush.bf16.msra.mxu0 0
        %803 = vmatpush.bf16.msra.mxu0 0
        %804 = vmatpush.bf16.msra.mxu0 0
        %805 = vmatpush.bf16.msra.mxu0 0
        %806 = vmatpush.bf16.msra.mxu0 0
        %807 = vmatpush.bf16.msra.mxu0 %v795
        %808 = vmatpush.bf16.msra.mxu0 %v794
        %809 = vmatmul.bf16.gmra.mxu0 %v799
        %v810 = vpop.f32.mrf.mxu0
        %v811 = vadd.f32 0.0, %v810
        %v812 = vpop.f32.mrf.mxu0
        %813 = vdwg.mxu0
        %814 = vst [vmem:[%s324] sm:$0xff] %v811
        %vm815 = vcmp.lt.s32.totalorder %v342, 64
        %v816 = vsel %vm815, %v811, -1e+30
        %817 = vmax.xlane.f32.xlu0 %v816
        %v818 = vpop.xlane.xlu0 %817
        %v819 = vsub.f32 %v816, %v818
        %v820 = vmul.f32 %v819, 1.442695
        %v821 = vpow.pop %v820
        %822 = vadd.xlane.f32.xlu0 %v821
        %v823 = vpop.xlane.xlu0 %822
        %v824 = vlog2.pop %v823
        %v825 = vmul.f32 %v824, 0.6931472
        %v826 = vadd.f32 %v825, %v818
        %827 = vset.pattern.permute.xlu0 1
        %828 = vperm.xlu0 %827, %v340
        %v829 = vpop.permute.xlu0 %828
        %vm830 = vcmp.eq.s32.totalorder %v342, %v829
        %v831 = vsel %vm830, 1, 0
        %v832 = vcvt.s32.f32 %v831
        %v833 = vmul.f32 %v811, %v832
        %834 = vadd.xlane.f32.xlu0 %v833
        %v835 = vpop.xlane.xlu0 %834
        %v836 = vsub.f32 %v826, %v835
        %vm837 = vcmp.ne.s32.totalorder %v461, 7
        %v838 = vsel %vm837, 1, 0
        %v839 = vcvt.s32.f32 %v838
        %v840 = vmul.f32 %v836, %v839
        %v841 = vmul.f32 %v840, 0.071428575
        %vm842 = vcmask 7168
        %843 = vst.msk [vmem:[%s338] sm:$0xff] %vm842, %v841
        %s844 = sand.u32 %s205, 1
        %s845 = scalar_lea.sflag [#allocation3], %s844
        %s846 = sand.u32 %s205, 1
        %s847 = smul.addr %s846, 8
        %s848 = scalar_lea.vmem [#allocation2], %s847
        %p849 = scmp.lt.s32.totalorder %s24, 1
        %s850 = scalar_select %p849, %s24, 1
        %s851 = smul.addr %s850, 8
        %s852 = scalar_lea.vmem %s9, %s851
        // Predicated region
        $region53: #{forward.1} parent=51 // pred_check
          %p853 = pneg %p215
        $region54: #{forward.1} parent=51 // pred_check_branch
          %855 = sbr.rel (%p853) target = $region56
        $region55: #{forward.1} parent=51 // pred_region
          %857 = vsyncadd %s845, 0
          %s858 = smul.addr %s24, 8
          %s859 = scalar_lea.hbm %s8, %s858
          %s861 = sshll.u32 %s848, 4
          %s862 = int_to_ptr.vmem [resolvable:$true] %s861
          %s863 = sshll.u32 %s859, 4
          %s864 = int_to_ptr.hbm [resolvable:$true] %s863
          %866 = dma.vmem_to_hbm [thread:$0]  %s862, 128, %s864, %s845
        $region56: #{forward.1} parent=51 // pred_fallthru
          _
        // Predicated region
        $region57: #{forward.1} parent=51 // pred_check
          %p867 = pneg %p241
        $region58: #{forward.1} parent=51 // pred_check_branch
          %869 = sbr.rel (%p867) target = $region60
        $region59: #{forward.1} parent=51 // pred_region
          _
        $region60: #{forward.1} parent=51 // pred_fallthru
          _
      $region52: #{forward.1} parent=5 // pred_fallthru
        _
      %p870 = scmp.le.s32.totalorder 2, %s19
      // Predicated region
      $region61: #{forward.1} parent=5 // pred_check
        %p871 = pneg %p870
      $region62: #{forward.1} parent=5 // pred_check_branch
        %873 = sbr.rel (%p871) target = $region64
      $region63: #{forward.1} parent=5 // pred_region
        %s874 = ssub.s32 %s19, 2
        // Predicated region
        $region65: #{forward.1} parent=63 // pred_check
          %p875 = pneg %p221
        $region66: #{forward.1} parent=63 // pred_check_branch
          %877 = sbr.rel (%p875) target = $region68
        $region67: #{forward.1} parent=63 // pred_region
          %s878 = sand.u32 %s206, 1
          %s879 = scalar_lea.sflag [#allocation3], %s878
          %s880 = sand.u32 %s206, 1
          %s881 = smul.addr %s880, 8
          %s882 = scalar_lea.vmem [#allocation2], %s881
          %884 = dma.done %s879, 128
        $region68: #{forward.1} parent=63 // pred_fallthru
          _
        // Predicated region
        $region69: #{forward.1} parent=63 // pred_check
          %p885 = pneg %p247
        $region70: #{forward.1} parent=63 // pred_check_branch
          %887 = sbr.rel (%p885) target = $region72
        $region71: #{forward.1} parent=63 // pred_region
          %p888 = scmp.lt.s32.totalorder %s25, 1
          %s889 = scalar_select %p888, %s25, 1
          %s890 = smul.addr %s889, 8
          %s891 = scalar_lea.vmem %s9, %s890
        $region72: #{forward.1} parent=63 // pred_fallthru
          _
      $region64: #{forward.1} parent=5 // pred_fallthru
        _
    $region6: #{forward.1} parent=1 // loop_footer
      %s23 = sadd.s32 1, %s19
    $region7: #{forward.1} parent=1 // loop_footer_branch
      %18 = sbr.rel target = $region3
    $region8: #{forward.1} parent=1 // loop_exit
      _
    %892 = vsyncpa [#allocation3], 1
    %s893 = scalar_lea.sflag [#allocation3], 1
    %894 = vsyncpa %s893, 1

</llo_original>
